<compile_context>
chip_gen: v5e
topology: v5e:2x2
jax: 0.10.0
libtpu: 0.0.40
codegen_flags: <defaults>
</compile_context>

<pallas_src>
import functools

import jax
import jax.numpy as jnp
from jax import lax
from jax.experimental import pallas as pl
from jax.experimental.pallas import tpu as pltpu


_VMEM_LIMIT = 48 << 20          # scoped-VMEM limit: safe on v5e/v6e/v7x
_TILE_BUDGET = 20 << 20         # per-step byte budget used to size row strips


# ----------------------------- Pallas kernels ------------------------------

def _convt2x2_kernel(x_ref, w_ref, b_ref, o_ref):
    """ConvTranspose2d(k=2, s=2) as a matmul, one output-row parity per step.

    x_ref: (TH1, W1, Cin)     rows of the deep feature map
    w_ref: (2, Cin, 2*Cup)    weight, [di, c, dj*Cup + o]   (resident, bf16)
    b_ref: (1, 2*Cup)         bias tiled over dj            (resident, f32)
    o_ref: (TH1, W1, 2*Cup)   block of the (N, H1, 2, W1, 2*Cup) output at
                              di = program_id(2); the BlockSpec scatter makes
                              the NHWC upsampled tensor a free reshape.
    """
    th1, w1, cin = x_ref.shape
    di = pl.program_id(2)
    x = x_ref[...].reshape(th1 * w1, cin)
    y = jnp.dot(x, w_ref[di], preferred_element_type=jnp.float32) + b_ref[...]
    o_ref[...] = y.reshape(th1, w1, w_ref.shape[2]).astype(o_ref.dtype)


def _conv3x3_bn_relu_kernel(*refs, Cins, Coffs):
    """Fused Conv2d(3x3, pad=1) + folded BatchNorm + ReLU on one row strip.

    The logical conv input is the channel concat of k streams; the concat is
    fused into the im2col buffer, so no concatenated tensor ever touches HBM.

    refs (k = len(Cins)):
      [main_0, top_0, bot_0, ..., main_{k-1}, top_{k-1}, bot_{k-1},  # activations
       w,                                                            # (9*sumC, Cout)
       scale, bias,                                                  # (1, Cout) f32
       out,                                                          # (TH, W, Cout)
       scr_0, ..., scr_{k-1},                                        # (TH+2, W+2, Ci)
       patch]                                                        # (TH, W, 9*sumC)
    """
    k = len(Cins)
    ins = refs[:3 * k]
    w_ref, s_ref, b_ref = refs[3 * k], refs[3 * k + 1], refs[3 * k + 2]
    o_ref = refs[3 * k + 3]
    scrs = refs[3 * k + 4:4 * k + 4]
    patch = refs[4 * k + 4]

    TH, W, Cout = o_ref.shape
    r = pl.program_id(1)
    n_r = pl.num_programs(1)

    # --- zero-padded halo strips; only the 1-element border ring is zeroed ---
    for i in range(k):
        C = Cins[i]
        scr = scrs[i]
        main, top, bot = ins[3 * i], ins[3 * i + 1], ins[3 * i + 2]

        zrow = jnp.zeros((1, W + 2, C), scr.dtype)
        zcol = jnp.zeros((TH, 1, C), scr.dtype)
        scr[0:1, :, :] = zrow                      # top halo row (image-edge default)
        scr[TH + 1:TH + 2, :, :] = zrow            # bottom halo row
        scr[1:TH + 1, 0:1, :] = zcol               # left pad column
        scr[1:TH + 1, W + 1:W + 2, :] = zcol       # right pad column
        scr[1:TH + 1, 1:W + 1, :] = main[...]      # interior rows of this strip

        @pl.when(r > 0)                            # real top halo inside the image
        def _():
            scr[0:1, 1:W + 1, :] = top[...]

        @pl.when(r < n_r - 1)                      # real bottom halo inside the image
        def _():
            scr[TH + 1:TH + 2, 1:W + 1, :] = bot[...]

    # --- im2col: 9 shifted copies per stream into one (TH, W, 9*sumC) buffer ---
    for i in range(k):
        C = Cins[i]
        scr = scrs[i]
        for ky in range(3):
            for kx in range(3):
                col = Coffs[i] + (ky * 3 + kx) * C
                patch[:, :, col:col + C] = scr[ky:ky + TH, kx:kx + W, :]

    # --- single MXU matmul (K = 9*sumC), f32 accumulation, f32 BN+ReLU epilogue
    ktot = patch.shape[-1]
    acc = jnp.dot(patch[...].reshape(TH * W, ktot), w_ref[...],
                  preferred_element_type=jnp.float32)
    y = jnp.maximum(acc * s_ref[...] + b_ref[...], 0.0)
    o_ref[...] = y.reshape(TH, W, Cout).astype(o_ref.dtype)
    # TODO(synk): for Cout << 128 a lane-dense (W*Cout) out layout would avoid
    # masked stores; skipped since production channel counts are >= 128.
    # TODO(synk): very wide layers would also want a Cout-tile grid axis to
    # bound the f32 accumulator; here it is folded into the TH byte budget.


# ------------------------------- wrappers -----------------------------------

def _row_tile_from_budget(H, per_step_bytes, n_batch, budget):
    """Largest divisor of H whose per-step footprint fits the budget.  When
    N == 1 (and H is even) keep >= 2 strips so v7x megacore has 2 parallel
    steps; on single-core v5e/v6e this costs nothing at these sizes."""
    prefer_split = (n_batch == 1 and H % 2 == 0)
    for th in sorted((d for d in range(1, H + 1) if H % d == 0), reverse=True):
        if prefer_split and H // th < 2:
            continue
        if per_step_bytes(th) <= budget:
            return th
    return 1


def conv_transpose_2x2(x_nhwc, wt, bt, *, out_dtype, budget=_TILE_BUDGET):
    """ConvTranspose2d(kernel=2, stride=2).  wt: (Cin, Cup, 2, 2) torch layout.

    The kernel writes a (N, H1, 2, W1, 2*Cup) tensor whose row-major reshape is
    exactly the NHWC upsampled output -> no XLA depth-to-space pass.
    """
    N, H1, W1, Cin = x_nhwc.shape
    Cup = int(wt.shape[1])
    # (c, o, di, dj) -> (di, c, dj*Cup + o)
    w = jnp.transpose(wt, (2, 0, 3, 1)).reshape(2, Cin, 2 * Cup).astype(x_nhwc.dtype)
    b = jnp.tile(bt.astype(jnp.float32), 2).reshape(1, 2 * Cup)
    act_bytes = x_nhwc.dtype.itemsize
    out_bytes = jnp.dtype(out_dtype).itemsize

    def per_step_bytes(th):
        return (2 * th * W1 * Cin * act_bytes          # input block (double-buffered)
                + 2 * Cin * 2 * Cup * act_bytes        # resident weight
                + 2 * th * W1 * 2 * Cup * out_bytes    # output block (double-buffered)
                + th * W1 * 2 * Cup * 4)               # f32 accumulator

    TH1 = _row_tile_from_budget(H1, per_step_bytes, N, budget)
    nR1 = H1 // TH1

    y = pl.pallas_call(
        _convt2x2_kernel,
        out_shape=jax.ShapeDtypeStruct((N, H1, 2, W1, 2 * Cup), out_dtype),
        grid=(N, nR1, 2),
        in_specs=[
            pl.BlockSpec((None, TH1, W1, Cin), lambda n, r, di: (n, r, 0, 0)),
            pl.BlockSpec((2, Cin, 2 * Cup), lambda n, r, di: (0, 0, 0),
                         pipeline_mode=pl.Buffered(1)),
            pl.BlockSpec((1, 2 * Cup), lambda n, r, di: (0, 0),
                         pipeline_mode=pl.Buffered(1)),
        ],
        out_specs=pl.BlockSpec((None, TH1, None, W1, 2 * Cup),
                               lambda n, r, di: (n, r, di, 0, 0)),
        compiler_params=pltpu.CompilerParams(
            dimension_semantics=("parallel", "parallel", "arbitrary"),
            vmem_limit_bytes=_VMEM_LIMIT),
    )(x_nhwc, w, b)
    # pure row-major view: (N, H1, 2, W1, 2*Cup) == (N, 2*H1, 2*W1, Cup)
    return y.reshape(N, 2 * H1, 2 * W1, Cup)


def conv3x3_bn_relu(inputs, w_stacked, scale, bias, *, out_dtype,
                    budget=_TILE_BUDGET):
    """Conv2d(3x3, pad=1) over channel-concat(inputs) -> BatchNorm(eval) -> ReLU.

    inputs:    list of NHWC arrays sharing (N, H, W, dtype); the logical conv
               input is their channel concatenation (fused via im2col).
    w_stacked: (9 * sum(Ci), Cout); rows ordered stream-major, then (ky, kx, c).
    """
    N, H, W, _ = inputs[0].shape
    Cins = tuple(int(x.shape[-1]) for x in inputs)
    Coffs = tuple(9 * sum(Cins[:i]) for i in range(len(Cins)))
    Ktot = 9 * sum(Cins)
    Cout = int(w_stacked.shape[-1])
    act_dtype = inputs[0].dtype
    act_bytes = act_dtype.itemsize
    out_bytes = jnp.dtype(out_dtype).itemsize

    def per_step_bytes(th):
        b = 0
        for C in Cins:
            b += 2 * th * W * C * act_bytes            # main block (double-buffered)
            b += 2 * 2 * W * C * act_bytes             # top/bottom halo blocks
            b += (th + 2) * (W + 2) * C * act_bytes    # padded halo-strip scratch
        b += th * W * Ktot * act_bytes                 # im2col scratch
        b += Ktot * Cout * act_bytes                   # resident weight (Buffered(1))
        b += 2 * th * W * Cout * out_bytes             # output block (double-buffered)
        b += 2 * th * W * Cout * 4                     # f32 accumulator / epilogue
        return b

    TH = _row_tile_from_budget(H, per_step_bytes, N, budget)
    nR = H // TH

    kern = functools.partial(_conv3x3_bn_relu_kernel, Cins=Cins, Coffs=Coffs)

    in_specs, args = [], []
    for x, C in zip(inputs, Cins):
        in_specs += [
            # non-overlapping row strip
            pl.BlockSpec((None, TH, W, C), lambda n, r: (n, r, 0, 0)),
            # one-row top / bottom halos (clamped at the image border; masked
            # inside the kernel with pl.when)
            pl.BlockSpec((None, 1, W, C),
                         lambda n, r: (n, jnp.maximum(r * TH - 1, 0), 0, 0)),
            pl.BlockSpec((None, 1, W, C),
                         lambda n, r: (n, jnp.minimum(r * TH + TH, H - 1), 0, 0)),
        ]
        args += [x, x, x]
    # grid-invariant operands: single-buffered residents (VMEM saving on v7x)
    in_specs += [
        pl.BlockSpec((Ktot, Cout), lambda n, r: (0, 0),
                     pipeline_mode=pl.Buffered(1)),
        pl.BlockSpec((1, Cout), lambda n, r: (0, 0),
                     pipeline_mode=pl.Buffered(1)),
        pl.BlockSpec((1, Cout), lambda n, r: (0, 0),
                     pipeline_mode=pl.Buffered(1)),
    ]
    args += [w_stacked,
             scale.reshape(1, Cout).astype(jnp.float32),
             bias.reshape(1, Cout).astype(jnp.float32)]

    return pl.pallas_call(
        kern,
        out_shape=jax.ShapeDtypeStruct((N, H, W, Cout), out_dtype),
        grid=(N, nR),
        in_specs=in_specs,
        out_specs=pl.BlockSpec((None, TH, W, Cout), lambda n, r: (n, r, 0, 0)),
        scratch_shapes=[pltpu.VMEM((TH + 2, W + 2, C), act_dtype) for C in Cins]
                       + [pltpu.VMEM((TH, W, Ktot), act_dtype)],
        compiler_params=pltpu.CompilerParams(
            dimension_semantics=("parallel", "parallel"),
            vmem_limit_bytes=_VMEM_LIMIT),
    )(*args)


def unet_up_block(x1_nhwc, x2_nhwc, p, *, act_dtype=jnp.bfloat16):
    """Forward of UNetUpBlock (inference mode). NHWC in / NHWC f32 out."""
    up = conv_transpose_2x2(x1_nhwc.astype(act_dtype), p["up_w"], p["up_b"],
                            out_dtype=act_dtype)

    th, tw = up.shape[1], up.shape[2]
    h2, w2 = x2_nhwc.shape[1], x2_nhwc.shape[2]
    if (th, tw) != (h2, w2):
        dy, dx = th - h2, tw - w2
        if dy >= 0 and dx >= 0:
            x2_nhwc = jnp.pad(
                x2_nhwc,
                ((0, 0), (dy // 2, dy - dy // 2), (dx // 2, dx - dx // 2), (0, 0)))
        elif dy <= 0 and dx <= 0:
            cy, cx = -dy, -dx
            x2_nhwc = x2_nhwc[:, cy // 2:h2 - (cy - cy // 2),
                              cx // 2:w2 - (cx - cx // 2), :]
        else:
            # TODO(synk): mixed-sign mismatch uses F.interpolate(mode='bicubic');
            # no clean Pallas equivalent implemented here.
            raise NotImplementedError("bicubic resize branch not implemented")
    x2a = x2_nhwc.astype(act_dtype)

    # torch.cat([x2, x1_up], dim=1) fused into conv1 by stacking its weight in
    # the same (x2 | up) stream order used by the im2col buffer.
    c2, cup = x2a.shape[-1], up.shape[-1]
    w1 = p["c1_w"]                                       # HWIO (3, 3, c2+cup, Cout)
    cout = int(w1.shape[-1])
    w1_stacked = jnp.concatenate(
        [w1[:, :, :c2, :].reshape(9 * c2, cout),
         w1[:, :, c2:, :].reshape(9 * cup, cout)], axis=0).astype(act_dtype)
    h = conv3x3_bn_relu([x2a, up], w1_stacked, p["c1_scale"], p["c1_bias"],
                        out_dtype=act_dtype)

    w2 = p["c2_w"]                                       # HWIO (3, 3, cout, cout)
    w2_stacked = w2.reshape(9 * int(w2.shape[2]), int(w2.shape[3])).astype(act_dtype)
    out = conv3x3_bn_relu([h], w2_stacked, p["c2_scale"], p["c2_bias"],
                          out_dtype=jnp.float32)
    # Dropout2d inactive in eval mode.
    # TODO(synk): conv1/conv2 could be fused per row strip (recompute a 1-row
    # conv1 halo) so the intermediate activation never reaches HBM; likewise the
    # up tensor could be pixel-shuffled inside conv1 instead of via its own
    # pallas_call (needs lane-dim relayout / strided scatter in-kernel).
    return out


# ------------------------------ reference ----------------------------------

def _ref_forward(x1_nhwc, x2_nhwc, p):
    hp = lax.Precision.HIGHEST
    N, H1, W1, _ = x1_nhwc.shape
    Cup = p["up_w"].shape[1]
    t = jnp.einsum("nijc,codq->nijodq", x1_nhwc, p["up_w"], precision=hp)
    t = jnp.transpose(t, (0, 1, 4, 2, 5, 3)).reshape(N, 2 * H1, 2 * W1, Cup)
    t = t + p["up_b"]
    x = jnp.concatenate([x2_nhwc, t], axis=-1)

    def conv(x, w, s, b):
        y = lax.conv_general_dilated(
            x, w, (1, 1), ((1, 1), (1, 1)),
            dimension_numbers=("NHWC", "HWIO", "NHWC"), precision=hp)
        return jnp.maximum(y * s + b, 0.0)

    x = conv(x, p["c1_w"], p["c1_scale"], p["c1_bias"])
    x = conv(x, p["c2_w"], p["c2_scale"], p["c2_bias"])
    return x


# --------------------------------- main -------------------------------------

if __name__ == "__main__":
    in_channels, out_channels = 8, 4      # x1 channels, x2 / output channels
    N, H1, W1 = 2, 8, 8                   # deeper feature map
    H2, W2 = 16, 16                       # skip connection (2x spatial)
    eps = 1e-5

    key = jax.random.PRNGKey(0)
    ks = jax.random.split(key, 8)
    x1_nchw = jax.random.normal(ks[0], (N, in_channels, H1, W1), jnp.float32)
    x2_nchw = jax.random.normal(ks[1], (N, out_channels, H2, W2), jnp.float32)

    # Parameters (deterministic synthetic init; shapes match nn.Module.__init__).
    up_w = 0.1 * jax.random.normal(ks[2], (in_channels, in_channels // 2, 2, 2), jnp.float32)
    up_b = 0.1 * jax.random.normal(ks[3], (in_channels // 2,), jnp.float32)
    conv_in = out_channels + in_channels // 2
    c1_w = 0.1 * jax.random.normal(ks[4], (out_channels, conv_in, 3, 3), jnp.float32)
    c1_b = 0.1 * jax.random.normal(ks[5], (out_channels,), jnp.float32)
    c2_w = 0.1 * jax.random.normal(ks[6], (out_channels, out_channels, 3, 3), jnp.float32)
    c2_b = 0.1 * jax.random.normal(ks[7], (out_channels,), jnp.float32)

    # BatchNorm2d defaults: gamma=1, beta=0, running_mean=0, running_var=1 (eval).
    ones = jnp.ones((out_channels,), jnp.float32)
    zeros = jnp.zeros((out_channels,), jnp.float32)

    def fold_bn(conv_bias, gamma, beta, mean, var):
        scale = gamma / jnp.sqrt(var + eps)
        bias = (conv_bias - mean) * scale + beta
        return scale, bias

    s1, b1 = fold_bn(c1_b, ones, zeros, zeros, ones)
    s2, b2 = fold_bn(c2_b, ones, zeros, zeros, ones)

    params = {
        "up_w": up_w, "up_b": up_b,
        "c1_w": jnp.transpose(c1_w, (2, 3, 1, 0)), "c1_scale": s1, "c1_bias": b1,
        "c2_w": jnp.transpose(c2_w, (2, 3, 1, 0)), "c2_scale": s2, "c2_bias": b2,
    }

    # NCHW (PyTorch) -> NHWC (kernel layout)
    x1 = jnp.transpose(x1_nchw, (0, 2, 3, 1))
    x2 = jnp.transpose(x2_nchw, (0, 2, 3, 1))

    out_nhwc = unet_up_block(x1, x2, params)
    out = jnp.transpose(out_nhwc, (0, 3, 1, 2))          # back to NCHW
    jax.block_until_ready(out)

    assert out.shape == (N, out_channels, H2, W2), out.shape

    # Reference in full-f32 HIGHEST precision; kernels use bf16 storage with f32
    # accumulation, so the tolerance is looser than a pure-f32 pipeline.
    ref_nhwc = _ref_forward(x1, x2, params)
    ref = jnp.transpose(ref_nhwc, (0, 3, 1, 2))
    err = float(jnp.max(jnp.abs(out - ref)))
    assert err < 6e-2, f"max abs diff vs reference = {err}"

    print("KERNEL_OK")
</pallas_src>

<mosaic_0001>
module attributes {stable_mosaic.version = 11 : i64} {
  func.func @_convt2x2_kernel(%arg0: i32, %arg1: i32, %arg2: i32, %arg3: memref<1x8x8x8xbf16, #tpu.memory_space<vmem>>, %arg4: memref<2x8x8xbf16, #tpu.memory_space<vmem>>, %arg5: memref<1x8xf32, #tpu.memory_space<vmem>>, %arg6: memref<1x8x1x8x8xbf16, #tpu.memory_space<vmem>>) attributes {dimension_semantics = [#tpu.dimension_semantics<parallel>, #tpu.dimension_semantics<parallel>, #tpu.dimension_semantics<arbitrary>], iteration_bounds = array<i64: 2, 1, 2>, scalar_prefetch = 0 : i64, scratch_operands = 0 : i64, tpu.core_type = #tpu.core_type<tc>, window_params = [{transform_indices = @transform_0, window_bounds = array<i64: 1, 8, 8, 8>}, {pipeline_mode = #tpu.pipeline_mode<synchronous>, transform_indices = @transform_1, window_bounds = array<i64: 2, 8, 8>}, {pipeline_mode = #tpu.pipeline_mode<synchronous>, transform_indices = @transform_2, window_bounds = array<i64: 1, 8>}, {transform_indices = @transform_3, window_bounds = array<i64: 1, 8, 1, 8, 8>}]} {
    %c0 = arith.constant 0 : index
    %c0_0 = arith.constant 0 : index
    %c0_1 = arith.constant 0 : index
    %c0_2 = arith.constant 0 : index
    %0 = vector.load %arg3[%c0, %c0_0, %c0_1, %c0_2] : memref<1x8x8x8xbf16, #tpu.memory_space<vmem>>, vector<1x8x8x8xbf16>
    %1 = vector.shape_cast %0 : vector<1x8x8x8xbf16> to vector<8x8x8xbf16>
    %2 = vector.shape_cast %1 : vector<8x8x8xbf16> to vector<64x8xbf16>
    %3 = arith.index_cast %arg2 : i32 to index
    %c0_3 = arith.constant 0 : index
    %c0_4 = arith.constant 0 : index
    %4 = vector.load %arg4[%3, %c0_3, %c0_4] : memref<2x8x8xbf16, #tpu.memory_space<vmem>>, vector<1x8x8xbf16>
    %5 = vector.shape_cast %4 : vector<1x8x8xbf16> to vector<8x8xbf16>
    %cst = arith.constant dense<0.000000e+00> : vector<64x8xf32>
    %6 = tpu.matmul %2, %5, %cst {dimension_numbers = #tpu.dot_dimension_numbers<[1], [0], [0], [1], [0, 0, 1, 1], [], []>} : vector<64x8xbf16>, vector<8x8xbf16>, vector<64x8xf32> -> vector<64x8xf32>
    %c0_5 = arith.constant 0 : index
    %c0_6 = arith.constant 0 : index
    %7 = vector.load %arg5[%c0_5, %c0_6] : memref<1x8xf32, #tpu.memory_space<vmem>>, vector<1x8xf32>
    %8 = vector.broadcast %7 : vector<1x8xf32> to vector<64x8xf32>
    %9 = arith.addf %6, %8 : vector<64x8xf32>
    %10 = vector.shape_cast %9 : vector<64x8xf32> to vector<8x8x8xf32>
    %11 = arith.truncf %10 : vector<8x8x8xf32> to vector<8x8x8xbf16>
    %c0_7 = arith.constant 0 : index
    %c0_8 = arith.constant 0 : index
    %c0_9 = arith.constant 0 : index
    %c0_10 = arith.constant 0 : index
    %c0_11 = arith.constant 0 : index
    %12 = vector.load %arg6[%c0_7, %c0_8, %c0_9, %c0_10, %c0_11] : memref<1x8x1x8x8xbf16, #tpu.memory_space<vmem>>, vector<1x8x1x8x8xbf16>
    %13 = vector.shape_cast %12 : vector<1x8x1x8x8xbf16> to vector<8x8x8xbf16>
    %14 = vector.shape_cast %11 : vector<8x8x8xbf16> to vector<1x8x1x8x8xbf16>
    tpu.vector_store %arg6[%c0_7, %c0_8, %c0_9, %c0_10, %c0_11], %14 {strides = array<i32>} : memref<1x8x1x8x8xbf16, #tpu.memory_space<vmem>>, vector<1x8x1x8x8xbf16>,
    return
  }
  func.func @transform_0(%arg0: i32, %arg1: i32, %arg2: i32) -> (i32, i32, i32, i32) {
    %c0_i32 = arith.constant 0 : i32
    %c0_i32_0 = arith.constant 0 : i32
    %c0_i32_1 = arith.constant 0 : i32
    return %arg0, %arg1, %c0_i32, %c0_i32_0 : i32, i32, i32, i32
  }
  func.func @transform_1(%arg0: i32, %arg1: i32, %arg2: i32) -> (i32, i32, i32) {
    %c0_i32 = arith.constant 0 : i32
    %c0_i32_0 = arith.constant 0 : i32
    %c0_i32_1 = arith.constant 0 : i32
    %c0_i32_2 = arith.constant 0 : i32
    return %c0_i32, %c0_i32_0, %c0_i32_1 : i32, i32, i32
  }
  func.func @transform_2(%arg0: i32, %arg1: i32, %arg2: i32) -> (i32, i32) {
    %c0_i32 = arith.constant 0 : i32
    %c0_i32_0 = arith.constant 0 : i32
    %c0_i32_1 = arith.constant 0 : i32
    return %c0_i32, %c0_i32_0 : i32, i32
  }
  func.func @transform_3(%arg0: i32, %arg1: i32, %arg2: i32) -> (i32, i32, i32, i32, i32) {
    %c0_i32 = arith.constant 0 : i32
    %c0_i32_0 = arith.constant 0 : i32
    %c0_i32_1 = arith.constant 0 : i32
    return %arg0, %arg1, %arg2, %c0_i32, %c0_i32_0 : i32, i32, i32, i32, i32
  }
}

</mosaic_0001>

<llo_original>
// kernel: tpu_custom_call.1
$region0: #{tpu_custom_call.1}
  #allocation0 [shape = 'u32[]', space=smem, size = 0x4, offset = 0x4, fixed_abs, tag = 'smem constant byte address 0x4 - core index']
  #allocation1 [shape = 'u32[72,128]{1,0:T(1,128)}', space=vmem, size = 0x9000, scoped, tag = 'internal scratch']
  %s0 = inlined_call_operand.hbm [shape: bf16[2,8,8,8], index: 0, kind: input, shape index: {}]
  %s1 = inlined_call_operand.hbm [shape: bf16[2,8,8], index: 1, kind: input, shape index: {}]
  %s2 = inlined_call_operand.vmem [shape: f32[1,8], index: 2, kind: input, shape index: {}]
  %s3 = inlined_call_operand.hbm [shape: bf16[2,8,2,8,8], index: 3, kind: output, shape index: {}]
  %s4 = sld [smem:[#allocation0]]
  $region53: #{tpu_custom_call.1} parent=0
    _
  %s6 = ssub.s32 1, %s4
  %s7 = scalar_select 0, %s6, %s4
  $region1: #{tpu_custom_call.1} parent=0
    #allocation2 [shape = 'u8[32768]{0}', space=vmem, size = 0x8000, scoped, tag = 'input window, operand 0']
    #allocation3 [shape = 's32[2]{0}', space=sflag, size = 0x8, scoped, tag = 'scoped memory for tpu_custom_call.1']
    #allocation4 [shape = 's32[2]{0}', space=sflag, size = 0x8, scoped, tag = 'scoped memory for tpu_custom_call.1']
    #allocation5 [shape = 'u8[4096]{0}', space=vmem, size = 0x1000, scoped, tag = 'input window, operand 1, single buffered']
    #allocation6 [shape = 's32[1]{0}', space=sflag, size = 0x4, scoped, tag = 'scoped memory for tpu_custom_call.1']
    #allocation7 [shape = 'u8[32768]{0}', space=vmem, size = 0x8000, scoped, tag = 'output window, operand 0']
    %8 = vsyncpa [#allocation3], 0
    %s9 = scalar_lea.sflag [#allocation3], 1
    %10 = vsyncpa %s9, 0
    %11 = vsyncpa [#allocation6], 0
    %12 = vsyncpa [#allocation4], 0
    %s13 = scalar_lea.sflag [#allocation4], 1
    %14 = vsyncpa %s13, 0
    loop: start=0, step=1, limit=6
    $region2: #{tpu_custom_call.1} parent=1 // loop_pre_header
      _
    $region3: #{tpu_custom_call.1} parent=1 // loop_header
      %s16 = sphi 0, %s20
      %p17 = scmp.ge.s32.totalorder %s16, 6
      %s23 = sphi 0, %s42
      %s24 = sphi 0, %s38
      %s25 = sphi 0, %s34
      %s26 = sphi 0, %s23
      %s27 = sphi 0, %s24
      %s28 = sphi 0, %s25
      %s29 = sphi 0, %s26
      %s30 = sphi 0, %s27
      %s31 = sphi 0, %s28
      %s47 = sphi 0, %s49
      %s50 = sphi 0, %s47
      %s51 = sphi 0, %s50
      %s67 = sphi 0, %s51
      %s71 = sphi 0, %s71
      %s73 = sphi 0, %s71
      %s74 = sphi 0, %s73
      %s88 = sphi 0, %s74
      %s92 = sphi 0, %s92
      %s94 = sphi 0, %s92
      %s95 = sphi 0, %s94
      %s109 = sphi 0, %s95
      %s119 = sphi 0, %s121
      %s122 = sphi 0, %s119
      %s123 = sphi 0, %s122
      %s139 = sphi 0, %s123
    $region4: #{tpu_custom_call.1} parent=1 // loop_header_branch
      %19 = sbr.rel (%p17) target = $region8
    $region5: #{tpu_custom_call.1} parent=1 // loop_body
      %s21 = ssub.s32 %s16, 1
      %s22 = ssub.s32 %s16, 2
      %s32 = sadd.s32 1, %s25
      %p33 = scmp.ge.s32.totalorder %s32, 2
      %s34 = scalar_select %p33, 0, %s32
      %s35 = sadd.s32 1, %s24
      %s36 = scalar_select %p33, %s35, %s24
      %p37 = scmp.ge.s32.totalorder %s36, 1
      %s38 = scalar_select %p37, 0, %s36
      %s39 = sadd.s32 1, %s23
      %s40 = scalar_select %p37, %s39, %s23
      %p41 = scmp.ge.s32.totalorder %s40, 2
      %s42 = scalar_select %p41, 0, %s40
      %s43 = ssub.s32 %s23, %s42
      %s44 = ssub.s32 %s24, %s38
      %s45 = sor.u32 %s43, %s44
      %p46 = scmp.eq.s32.totalorder %s45, 0
      %s48 = sadd.s32 %s47, 1
      %s49 = scalar_select %p46, %s47, %s48
      %p52 = pneg %p46
      %p53 = scmp.eq.s32.totalorder %s16, 3
      %p54 = por %p52, %p53
      %p55 = scmp.ne.s32.totalorder %s47, %s50
      %p56 = scmp.eq.s32.totalorder %s16, 0
      %p57 = por %p55, %p56
      %p58 = scmp.ne.s32.totalorder %s47, %s50
      %p59 = scmp.eq.s32.totalorder %s21, 3
      %p60 = por %p58, %p59
      %p61 = scmp.ne.s32.totalorder %s50, %s51
      %p62 = scmp.eq.s32.totalorder %s21, 0
      %p63 = por %p61, %p62
      %p64 = scmp.ne.s32.totalorder %s50, %s51
      %p65 = scmp.eq.s32.totalorder %s22, 3
      %p66 = por %p64, %p65
      %p68 = scmp.ne.s32.totalorder %s51, %s67
      %p69 = scmp.eq.s32.totalorder %s22, 0
      %p70 = por %p68, %p69
      %s72 = sadd.s32 %s71, 1
      %p75 = scmp.eq.s32.totalorder %s16, 3
      %p76 = scmp.ne.s32.totalorder %s71, %s73
      %p77 = scmp.eq.s32.totalorder %s16, 0
      %p78 = por %p76, %p77
      %p79 = scmp.ne.s32.totalorder %s71, %s73
      %p80 = scmp.eq.s32.totalorder %s21, 3
      %p81 = por %p79, %p80
      %p82 = scmp.ne.s32.totalorder %s73, %s74
      %p83 = scmp.eq.s32.totalorder %s21, 0
      %p84 = por %p82, %p83
      %p85 = scmp.ne.s32.totalorder %s73, %s74
      %p86 = scmp.eq.s32.totalorder %s22, 3
      %p87 = por %p85, %p86
      %p89 = scmp.ne.s32.totalorder %s74, %s88
      %p90 = scmp.eq.s32.totalorder %s22, 0
      %p91 = por %p89, %p90
      %s93 = sadd.s32 %s92, 1
      %p96 = scmp.eq.s32.totalorder %s16, 3
      %p97 = scmp.ne.s32.totalorder %s92, %s94
      %p98 = scmp.eq.s32.totalorder %s16, 0
      %p99 = por %p97, %p98
      %p100 = scmp.ne.s32.totalorder %s92, %s94
      %p101 = scmp.eq.s32.totalorder %s21, 3
      %p102 = por %p100, %p101
      %p103 = scmp.ne.s32.totalorder %s94, %s95
      %p104 = scmp.eq.s32.totalorder %s21, 0
      %p105 = por %p103, %p104
      %p106 = scmp.ne.s32.totalorder %s94, %s95
      %p107 = scmp.eq.s32.totalorder %s22, 3
      %p108 = por %p106, %p107
      %p110 = scmp.ne.s32.totalorder %s95, %s109
      %p111 = scmp.eq.s32.totalorder %s22, 0
      %p112 = por %p110, %p111
      %s113 = ssub.s32 %s23, %s42
      %s114 = ssub.s32 %s24, %s38
      %s115 = sor.u32 %s113, %s114
      %s116 = ssub.s32 %s25, %s34
      %s117 = sor.u32 %s115, %s116
      %p118 = scmp.eq.s32.totalorder %s117, 0
      %s120 = sadd.s32 %s119, 1
      %s121 = scalar_select %p118, %s119, %s120
      %p124 = pneg %p118
      %p125 = scmp.eq.s32.totalorder %s16, 3
      %p126 = por %p124, %p125
      %p127 = scmp.ne.s32.totalorder %s119, %s122
      %p128 = scmp.eq.s32.totalorder %s16, 0
      %p129 = por %p127, %p128
      %p130 = scmp.ne.s32.totalorder %s119, %s122
      %p131 = scmp.eq.s32.totalorder %s21, 3
      %p132 = por %p130, %p131
      %p133 = scmp.ne.s32.totalorder %s122, %s123
      %p134 = scmp.eq.s32.totalorder %s21, 0
      %p135 = por %p133, %p134
      %p136 = scmp.ne.s32.totalorder %s122, %s123
      %p137 = scmp.eq.s32.totalorder %s22, 3
      %p138 = por %p136, %p137
      %p140 = scmp.ne.s32.totalorder %s123, %s139
      %p141 = scmp.eq.s32.totalorder %s22, 0
      %p142 = por %p140, %p141
      %p143 = scmp.le.s32.totalorder 1, %s16
      %p144 = scmp.lt.s32.totalorder %s16, 5
      %p145 = pnand %p143, %p144
      %p146 = pneg %p145
      // Predicated region
      $region9: #{tpu_custom_call.1} parent=5 // pred_check
        _
      $region10: #{tpu_custom_call.1} parent=5 // pred_check_branch
        %148 = sbr.rel (%p145) target = $region12
      $region11: #{tpu_custom_call.1} parent=5 // pred_region
        %s149 = ssub.s32 %s16, 1
        // Predicated region
        $region13: #{tpu_custom_call.1} parent=11 // pred_check
          %p150 = pneg %p84
        $region14: #{tpu_custom_call.1} parent=11 // pred_check_branch
          %152 = sbr.rel (%p150) target = $region16
        $region15: #{tpu_custom_call.1} parent=11 // pred_region
          %154 = vsyncadd [#allocation6], 0
          %s155 = sshll.u32 %s1, 4
          %s156 = int_to_ptr.hbm [resolvable:$true] %s155
          %s157 = sshll.u32 [#allocation5], 4
          %s158 = int_to_ptr.vmem [resolvable:$true] %s157
          %163 = dma.hbm_to_vmem [thread:$0]  %s156, 128, %s158, [#allocation6], 64, 64, 4
        $region16: #{tpu_custom_call.1} parent=11 // pred_fallthru
          _
        // Predicated region
        $region17: #{tpu_custom_call.1} parent=11 // pred_check
          %p164 = pneg %p105
        $region18: #{tpu_custom_call.1} parent=11 // pred_check_branch
          %166 = sbr.rel (%p164) target = $region20
        $region19: #{tpu_custom_call.1} parent=11 // pred_region
          _
        $region20: #{tpu_custom_call.1} parent=11 // pred_fallthru
          _
      $region12: #{tpu_custom_call.1} parent=5 // pred_fallthru
        _
      %p167 = scmp.lt.s32.totalorder %s16, 4
      // Predicated region
      $region21: #{tpu_custom_call.1} parent=5 // pred_check
        %p168 = pneg %p167
      $region22: #{tpu_custom_call.1} parent=5 // pred_check_branch
        %170 = sbr.rel (%p168) target = $region24
      $region23: #{tpu_custom_call.1} parent=5 // pred_region
        // Predicated region
        $region25: #{tpu_custom_call.1} parent=23 // pred_check
          %p171 = pneg %p57
        $region26: #{tpu_custom_call.1} parent=23 // pred_check_branch
          %173 = sbr.rel (%p171) target = $region28
        $region27: #{tpu_custom_call.1} parent=23 // pred_region
          %s174 = sand.u32 %s47, 1
          %s175 = scalar_lea.sflag [#allocation3], %s174
          %s176 = sand.u32 %s47, 1
          %s177 = smul.addr %s176, 32
          %s178 = scalar_lea.vmem [#allocation2], %s177
          %s179 = smul.u32 8, %s24
          %181 = vsyncadd %s175, 0
          %s182 = smul.addr %s23, 8
          %s183 = sadd.s32 %s179, %s182
          %s184 = smul.addr %s183, 4
          %s185 = scalar_lea.hbm %s0, %s184
          %s186 = sshll.u32 %s185, 4
          %s187 = int_to_ptr.hbm [resolvable:$true] %s186
          %s188 = sshll.u32 %s178, 4
          %s189 = int_to_ptr.vmem [resolvable:$true] %s188
          %194 = dma.hbm_to_vmem [thread:$0]  %s187, 512, %s189, %s175, 64, 64, 4
        $region28: #{tpu_custom_call.1} parent=23 // pred_fallthru
          _
      $region24: #{tpu_custom_call.1} parent=5 // pred_fallthru
        _
      %p195 = scmp.le.s32.totalorder 1, %s16
      %p196 = scmp.lt.s32.totalorder %s16, 5
      %p197 = pnand %p195, %p196
      %p198 = pneg %p197
      // Predicated region
      $region29: #{tpu_custom_call.1} parent=5 // pred_check
        _
      $region30: #{tpu_custom_call.1} parent=5 // pred_check_branch
        %200 = sbr.rel (%p197) target = $region32
      $region31: #{tpu_custom_call.1} parent=5 // pred_region
        %s201 = ssub.s32 %s16, 1
        %s202 = sand.u32 %s50, 1
        %s203 = scalar_lea.sflag [#allocation3], %s202
        %s204 = sand.u32 %s50, 1
        %s205 = smul.addr %s204, 32
        %s206 = scalar_lea.vmem [#allocation2], %s205
        // Predicated region
        $region33: #{tpu_custom_call.1} parent=31 // pred_check
          %p207 = pneg %p63
        $region34: #{tpu_custom_call.1} parent=31 // pred_check_branch
          %209 = sbr.rel (%p207) target = $region36
        $region35: #{tpu_custom_call.1} parent=31 // pred_region
          %211 = dma.done %s203, 512
        $region36: #{tpu_custom_call.1} parent=31 // pred_fallthru
          _
        // Predicated region
        $region37: #{tpu_custom_call.1} parent=31 // pred_check
          %p212 = pneg %p84
        $region38: #{tpu_custom_call.1} parent=31 // pred_check_branch
          %214 = sbr.rel (%p212) target = $region40
        $region39: #{tpu_custom_call.1} parent=31 // pred_region
          %216 = dma.done [#allocation6], 128
        $region40: #{tpu_custom_call.1} parent=31 // pred_fallthru
          _
        %s217 = sand.u32 %s50, 1
        %s218 = scalar_lea.sflag [#allocation3], %s217
        %s219 = sand.u32 %s50, 1
        %s220 = smul.addr %s219, 32
        %s221 = scalar_lea.vmem [#allocation2], %s220
        %p222 = pneg %p63
        %p223 = pneg %p60
        %p224 = pneg %p84
        %p225 = pneg %p81
        %p226 = pneg %p105
        %p227 = pneg %p102
        %p228 = pneg %p135
        %p229 = pneg %p132
        %s230 = sand.u32 %s122, 1
        %s231 = scalar_lea.sflag [#allocation4], %s230
        %s232 = sand.u32 %s122, 1
        %s233 = smul.addr %s232, 32
        %s234 = scalar_lea.vmem [#allocation7], %s233
        %s235 = smul.u32 8, %s27
        %s236 = smul.u32 8, %s27
        %v238 = vld [vmem:[%s206] sm:$0xf]
        %v239 = vld [vmem:[%s206 + $0x4] sm:$0xf]
        %v240 = vld [vmem:[%s206 + $0x8] sm:$0xf]
        %v241 = vld [vmem:[%s206 + $0xc] sm:$0xf]
        %v242 = vld [vmem:[%s206 + $0x10] sm:$0xf]
        %v243 = vld [vmem:[%s206 + $0x14] sm:$0xf]
        %v244 = vld [vmem:[%s206 + $0x18] sm:$0xf]
        %v245 = vld [vmem:[%s206 + $0x1c] sm:$0xf]
        %s246 = smul.addr %s28, 4
        %s247 = scalar_lea.vmem [#allocation5], %s246
        %v248 = vld [vmem:[%s247] sm:$0xf]
        %v249 = vld [vmem:[%s2] sm:$0x1]
        %v251 = vperm.slane %v249, 0
        %v261 = vunpack.c.l.b16 %v238
        %v262 = vunpack.c.l.b16 %v239
        %v263 = vunpack.c.l.b16 %v240
        %v264 = vunpack.c.l.b16 %v241
        %v265 = vunpack.c.l.b16 %v242
        %v266 = vunpack.c.l.b16 %v243
        %v267 = vunpack.c.l.b16 %v244
        %v268 = vunpack.c.l.b16 %v245
        %v269 = vpack.c.b16 %v262, %v261
        %v270 = vpack.c.b16 %v264, %v263
        %v271 = vpack.c.b16 %v266, %v265
        %v272 = vpack.c.b16 %v268, %v267
        %vm273 = vcmask 64512
        %v275 = vsel %vm273, %v269, 0
        %v278 = vsel %vm273, %v270, 0
        %v281 = vsel %vm273, %v271, 0
        %v284 = vsel %vm273, %v272, 0
        %vm286 = vcmask 1043456
        %v288 = vsel %vm286, %v248, 0
        %290 = vmatpush.bf16.msra.mxu0 0
        %291 = vmatpush.bf16.msra.mxu0 0
        %292 = vmatpush.bf16.msra.mxu0 0
        %293 = vmatpush.bf16.msra.mxu0 0
        %294 = vmatpush.bf16.msra.mxu0 0
        %295 = vmatpush.bf16.msra.mxu0 0
        %296 = vmatpush.bf16.msra.mxu0 0
        %297 = vmatpush.bf16.msra.mxu0 %v288
        %298 = vmatmul.bf16.gmra.mxu0 %v275
        %v299 = vpop.f32.mrf.mxu0
        %v300 = vadd.f32 %v251, %v299
        %v301 = vpop.f32.mrf.mxu0
        %v302 = vadd.f32 %v251, %v301
        %303 = vmatmul.bf16.gmra.mxu0 %v278
        %v304 = vpop.f32.mrf.mxu0
        %v305 = vadd.f32 %v251, %v304
        %v306 = vpop.f32.mrf.mxu0
        %v307 = vadd.f32 %v251, %v306
        %308 = vmatmul.bf16.gmra.mxu0 %v281
        %v309 = vpop.f32.mrf.mxu0
        %v310 = vadd.f32 %v251, %v309
        %v311 = vpop.f32.mrf.mxu0
        %v312 = vadd.f32 %v251, %v311
        %313 = vmatmul.bf16.gmra.mxu0 %v284
        %v314 = vpop.f32.mrf.mxu0
        %v315 = vadd.f32 %v251, %v314
        %v316 = vpop.f32.mrf.mxu0
        %v317 = vadd.f32 %v251, %v316
        %318 = vdwg.mxu0
        %v319 = vpack.c.bf16 %v300, %v300
        %v320 = vpack.c.bf16 %v302, %v302
        %v321 = vpack.c.bf16 %v305, %v305
        %v322 = vpack.c.bf16 %v307, %v307
        %v323 = vpack.c.bf16 %v310, %v310
        %v324 = vpack.c.bf16 %v312, %v312
        %v325 = vpack.c.bf16 %v315, %v315
        %v326 = vpack.c.bf16 %v317, %v317
        %vm327 = vcmask 60416
        %328 = vst.msk [vmem:[%s234] sm:$0xf] %vm327, %v319
        %329 = vst.msk [vmem:[%s234 + $0x4] sm:$0xf] %vm327, %v320
        %330 = vst.msk [vmem:[%s234 + $0x8] sm:$0xf] %vm327, %v321
        %331 = vst.msk [vmem:[%s234 + $0xc] sm:$0xf] %vm327, %v322
        %332 = vst.msk [vmem:[%s234 + $0x10] sm:$0xf] %vm327, %v323
        %333 = vst.msk [vmem:[%s234 + $0x14] sm:$0xf] %vm327, %v324
        %334 = vst.msk [vmem:[%s234 + $0x18] sm:$0xf] %vm327, %v325
        %335 = vst.msk [vmem:[%s234 + $0x1c] sm:$0xf] %vm327, %v326
        %s336 = sand.u32 %s122, 1
        %s337 = scalar_lea.sflag [#allocation4], %s336
        %s338 = sand.u32 %s122, 1
        %s339 = smul.addr %s338, 32
        %s340 = scalar_lea.vmem [#allocation7], %s339
        // Predicated region
        $region41: #{tpu_custom_call.1} parent=31 // pred_check
          %p341 = pneg %p132
        $region42: #{tpu_custom_call.1} parent=31 // pred_check_branch
          %343 = sbr.rel (%p341) target = $region44
        $region43: #{tpu_custom_call.1} parent=31 // pred_region
          %s344 = smul.u32 8, %s27
          %346 = vsyncadd %s337, 0
          %s347 = smul.addr %s344, 2
          %s348 = sadd.s32 %s28, %s347
          %s349 = smul.addr %s26, 16
          %s350 = sadd.s32 %s348, %s349
          %s351 = smul.addr %s350, 4
          %s352 = scalar_lea.hbm %s3, %s351
          %s353 = sshll.u32 %s340, 4
          %s354 = int_to_ptr.vmem [resolvable:$true] %s353
          %s355 = sshll.u32 %s352, 4
          %s356 = int_to_ptr.hbm [resolvable:$true] %s355
          %361 = dma.vmem_to_hbm [thread:$0]  %s354, 512, %s356, %s337, 64, 128, 4
        $region44: #{tpu_custom_call.1} parent=31 // pred_fallthru
          _
      $region32: #{tpu_custom_call.1} parent=5 // pred_fallthru
        _
      %p362 = scmp.le.s32.totalorder 2, %s16
      // Predicated region
      $region45: #{tpu_custom_call.1} parent=5 // pred_check
        %p363 = pneg %p362
      $region46: #{tpu_custom_call.1} parent=5 // pred_check_branch
        %365 = sbr.rel (%p363) target = $region48
      $region47: #{tpu_custom_call.1} parent=5 // pred_region
        %s366 = ssub.s32 %s16, 2
        // Predicated region
        $region49: #{tpu_custom_call.1} parent=47 // pred_check
          %p367 = pneg %p138
        $region50: #{tpu_custom_call.1} parent=47 // pred_check_branch
          %369 = sbr.rel (%p367) target = $region52
        $region51: #{tpu_custom_call.1} parent=47 // pred_region
          %s370 = sand.u32 %s123, 1
          %s371 = scalar_lea.sflag [#allocation4], %s370
          %s372 = sand.u32 %s123, 1
          %s373 = smul.addr %s372, 32
          %s374 = scalar_lea.vmem [#allocation7], %s373
          %376 = dma.done %s371, 512
        $region52: #{tpu_custom_call.1} parent=47 // pred_fallthru
          _
      $region48: #{tpu_custom_call.1} parent=5 // pred_fallthru
        _
    $region6: #{tpu_custom_call.1} parent=1 // loop_footer
      %s20 = sadd.s32 1, %s16
    $region7: #{tpu_custom_call.1} parent=1 // loop_footer_branch
      %15 = sbr.rel target = $region3
    $region8: #{tpu_custom_call.1} parent=1 // loop_exit
      _
    %377 = vsyncpa [#allocation3], 1
    %s378 = scalar_lea.sflag [#allocation3], 1
    %379 = vsyncpa %s378, 1
    %380 = vsyncpa [#allocation6], 1
    %381 = vsyncpa [#allocation4], 1
    %s382 = scalar_lea.sflag [#allocation4], 1
    %383 = vsyncpa %s382, 1

</llo_original>
